<compile_context>
chip_gen: v7x
topology: tpu7x:2x2x1
jax: 0.10.0
libtpu: 0.0.40
codegen_flags: <defaults>
</compile_context>

<pallas_src>
import functools

import jax
import jax.numpy as jnp
from jax.experimental import pallas as pl
from jax.experimental.pallas import tpu as pltpu


def _layernorm_kernel(alpha_ref, bias_ref, x_ref, o_ref, *, eps, hidden, groups):
    """x_ref/o_ref: (tile_rows, groups*hidden) VMEM blocks; alpha/bias: (1,) SMEM."""
    x = x_ref[...].astype(jnp.float32)
    alpha = alpha_ref[0]
    bias = bias_ref[0]
    nm1 = jnp.float32(hidden - 1)  # unbiased (torch.std) divisor
    epsf = jnp.float32(eps)

    def normalize(xg):
        # xg: (tile_rows, hidden) -- one normalization group.
        mean = jnp.mean(xg, axis=-1, keepdims=True)
        diff = xg - mean
        var = jnp.sum(diff * diff, axis=-1, keepdims=True) / nm1
        std = jnp.sqrt(var)
        # approx=True (EUP vrcp) deliberately NOT used: eps=1e-6 is added to
        # std, so the ~2^-12 relative error of the approximate reciprocal can
        # exceed a 1e-5 output tolerance; the kernel is HBM-bound, so the
        # exact per-row divide is fully hidden under the DMA anyway.
        scale = alpha * pl.reciprocal(std + epsf, approx=False)
        return diff * scale + bias

    if groups == 1:
        out = normalize(x)
    else:
        # Lane-packed path: the g groups are contiguous lane slices of the
        # 128-wide packed row.  Static slices + one concatenate keep every
        # block load/store lane-dense; the narrow per-group math is cheap.
        out = jnp.concatenate(
            [normalize(x[:, j * hidden:(j + 1) * hidden]) for j in range(groups)],
            axis=-1)

    o_ref[...] = out.astype(o_ref.dtype)


def _default_vmem_limit_bytes():
    """Scoped-VMEM limit: ~60% of this chip's physical per-core VMEM."""
    try:
        physical = pltpu.get_tpu_info().vmem_capacity_bytes
    except Exception:
        physical = 64 * 1024 * 1024  # v7x-sized safe fallback
    return int(min(max(physical * 6 // 10, 24 * 1024 * 1024), 96 * 1024 * 1024))


def _pick_tile_rows(rows, width, itemsize, vmem_limit_bytes):
    """Row tile for a (rows, width) layout: byte-targeted, VMEM-capped,
    sublane-rounded, and never so large that the grid collapses to 1 step."""
    # Sublane packing of the second-minor axis: f32 -> 8, bf16/f16 -> 16,
    # int8/fp8 -> 32 rows per native tile.
    sublane = {1: 32, 2: 16}.get(itemsize, 8)
    if rows <= sublane:
        return max(rows, 1)

    # VMEM bytes per tile row: in + out blocks are double-buffered by the
    # pipeline, plus ~4 live full-width f32 temporaries inside the kernel.
    bytes_per_row = width * (4 * itemsize + 4 * 4)
    tile = max((vmem_limit_bytes * 3 // 4) // bytes_per_row, 1)

    # Byte-target the *input* block at ~8 MiB: small blocks expose the fixed
    # ~0.35 us/step grid overhead (measured 29-63% of HBM roofline vs 85%+ for
    # big blocks); beyond ~8 MiB there is no further gain, only VMEM pressure.
    tile = min(tile, max((8 * 1024 * 1024) // (width * itemsize), 1))

    # Keep at least two grid steps so the "parallel" axis can be sharded
    # across v7x's two TensorCores (costs ~0.35 us on v5e/v6e, i.e. nothing).
    tile = min(tile, max(sublane, ((rows // 2) // sublane) * sublane))

    # Round down to the sublane packing so only the final block is partial.
    return max(sublane, (tile // sublane) * sublane)


def layer_normalization(x, alpha, bias, eps=1e-6, vmem_limit_bytes=None):
    """Pallas TPU forward pass of the PyTorch LayerNormalization module."""
    orig_shape = x.shape
    hidden = orig_shape[-1]
    x2d = x.reshape(-1, hidden)
    rows = x2d.shape[0]
    itemsize = jnp.dtype(x.dtype).itemsize
    if vmem_limit_bytes is None:
        vmem_limit_bytes = _default_vmem_limit_bytes()

    # Lane-dense packing factor: pack g = 128 // hidden rows per 128-wide row
    # when hidden is a divisor of 128 and the row count cooperates.  The
    # reshape is free (the 2-D buffer is contiguous in HBM).
    groups = 1
    if 8 <= hidden < 128 and 128 % hidden == 0 and rows % (128 // hidden) == 0:
        groups = 128 // hidden
    width = groups * hidden
    n_rows = rows // groups
    x_in = x2d.reshape(n_rows, width)

    tile_rows = _pick_tile_rows(n_rows, width, itemsize, vmem_limit_bytes)
    grid = (pl.cdiv(n_rows, tile_rows),)

    kernel = functools.partial(_layernorm_kernel, eps=eps, hidden=hidden,
                               groups=groups)
    # TODO(synk): for bf16/fp16 a fused sum / sum-of-squares single pass would
    # halve the f32 intermediate footprint (bigger tiles on v7x); kept two-pass
    # because E[x^2]-E[x]^2 cancels badly when |mean| >> std.

    out2d = pl.pallas_call(
        kernel,
        out_shape=jax.ShapeDtypeStruct((n_rows, width), x.dtype),
        grid=grid,
        in_specs=[
            pl.BlockSpec(memory_space=pltpu.MemorySpace.SMEM),  # alpha (1,)
            pl.BlockSpec(memory_space=pltpu.MemorySpace.SMEM),  # bias  (1,)
            pl.BlockSpec((tile_rows, width), lambda i: (i, 0)),
        ],
        out_specs=pl.BlockSpec((tile_rows, width), lambda i: (i, 0)),
        compiler_params=pltpu.CompilerParams(
            dimension_semantics=("parallel",),
            vmem_limit_bytes=int(vmem_limit_bytes),
        ),
    )(jnp.asarray(alpha, jnp.float32).reshape(1),
      jnp.asarray(bias, jnp.float32).reshape(1),
      x_in)

    return out2d.reshape(orig_shape)


def _reference(x, alpha, bias, eps):
    h = x.shape[-1]
    mean = jnp.mean(x, axis=-1, keepdims=True)
    std = jnp.sqrt(jnp.sum((x - mean) ** 2, axis=-1, keepdims=True) / (h - 1))
    return alpha[0] * (x - mean) / (std + eps) + bias[0]


if __name__ == "__main__":
    key = jax.random.PRNGKey(0)

    # Module __init__: alpha = ones(1), bias = zeros(1), eps = 1e-6.
    alpha = jnp.ones((1,), dtype=jnp.float32)
    bias = jnp.zeros((1,), dtype=jnp.float32)
    eps = 1e-6

    # Case 1: demo shape (batch=2, seq=8, hidden=32) -> lane-packed path (g=4).
    x1 = jax.random.normal(key, (2, 8, 32), dtype=jnp.float32)
    out1 = jax.block_until_ready(layer_normalization(x1, alpha, bias, eps=eps))
    ref1 = _reference(x1, alpha, bias, eps)
    assert out1.shape == x1.shape and out1.dtype == x1.dtype
    assert jnp.allclose(out1, ref1, atol=1e-5, rtol=1e-5), "mismatch (case 1, packed)"

    # Case 2: rows = 15 (not divisible by the pack factor or the sublane tile)
    # -> plain path, 2-step grid with a masked partial final block.
    x2 = jax.random.normal(jax.random.PRNGKey(1), (3, 5, 32), dtype=jnp.float32)
    out2 = jax.block_until_ready(layer_normalization(x2, alpha, bias, eps=eps))
    ref2 = _reference(x2, alpha, bias, eps)
    assert jnp.allclose(out2, ref2, atol=1e-5, rtol=1e-5), "mismatch (case 2, plain)"

    # Case 3: bf16 input, hidden=64 (g=2), multi-step packed grid.
    x3 = jax.random.normal(jax.random.PRNGKey(2), (4, 16, 64),
                           dtype=jnp.float32).astype(jnp.bfloat16)
    out3 = jax.block_until_ready(layer_normalization(x3, alpha, bias, eps=eps))
    ref3 = _reference(x3.astype(jnp.float32), alpha, bias, eps)
    assert jnp.allclose(out3.astype(jnp.float32), ref3, atol=3e-2, rtol=3e-2), \
        "mismatch (case 3, bf16 packed)"

    print("KERNEL_OK")
</pallas_src>

<mosaic_0001>
module attributes {stable_mosaic.version = 11 : i64} {
  func.func @_layernorm_kernel(%arg0: i32, %arg1: memref<1xf32, #tpu.memory_space<smem>>, %arg2: memref<1xf32, #tpu.memory_space<smem>>, %arg3: memref<4x128xf32, #tpu.memory_space<vmem>>, %arg4: memref<4x128xf32, #tpu.memory_space<vmem>>) attributes {dimension_semantics = [#tpu.dimension_semantics<parallel>], iteration_bounds = array<i64: 1>, scalar_prefetch = 0 : i64, scratch_operands = 0 : i64, tpu.core_type = #tpu.core_type<tc>, window_params = [{transform_indices = @transform_0, window_bounds = array<i64: 1>}, {transform_indices = @transform_1, window_bounds = array<i64: 1>}, {transform_indices = @transform_2, window_bounds = array<i64: 4, 128>}, {transform_indices = @transform_3, window_bounds = array<i64: 4, 128>}]} {
    %c0 = arith.constant 0 : index
    %c0_0 = arith.constant 0 : index
    %0 = vector.load %arg3[%c0, %c0_0] : memref<4x128xf32, #tpu.memory_space<vmem>>, vector<4x128xf32>
    %c0_1 = arith.constant 0 : index
    %1 = memref.load %arg1[%c0_1] : memref<1xf32, #tpu.memory_space<smem>>
    %c0_2 = arith.constant 0 : index
    %2 = memref.load %arg2[%c0_2] : memref<1xf32, #tpu.memory_space<smem>>
    %3 = vector.extract_strided_slice %0 {offsets = [0, 0], sizes = [4, 32], strides = [1, 1]} : vector<4x128xf32> to vector<4x32xf32>
    %cst = arith.constant dense<0.000000e+00> : vector<4xf32>
    %4 = vector.multi_reduction <add>, %3, %cst [1] : vector<4x32xf32> to vector<4xf32>
    %5 = vector.shape_cast %4 : vector<4xf32> to vector<4x1xf32>
    %cst_3 = arith.constant 3.200000e+01 : f32
    %6 = vector.broadcast %cst_3 : f32 to vector<4x1xf32>
    %7 = arith.divf %5, %6 : vector<4x1xf32>
    %8 = vector.broadcast %7 : vector<4x1xf32> to vector<4x32xf32>
    %9 = arith.subf %3, %8 : vector<4x32xf32>
    %10 = arith.mulf %9, %9 : vector<4x32xf32>
    %cst_4 = arith.constant dense<0.000000e+00> : vector<4xf32>
    %11 = vector.multi_reduction <add>, %10, %cst_4 [1] : vector<4x32xf32> to vector<4xf32>
    %12 = vector.shape_cast %11 : vector<4xf32> to vector<4x1xf32>
    %cst_5 = arith.constant 3.100000e+01 : f32
    %13 = vector.broadcast %cst_5 : f32 to vector<4x1xf32>
    %14 = arith.divf %12, %13 : vector<4x1xf32>
    %15 = math.sqrt %14 : vector<4x1xf32>
    %cst_6 = arith.constant 9.99999997E-7 : f32
    %16 = vector.broadcast %cst_6 : f32 to vector<4x1xf32>
    %17 = arith.addf %15, %16 : vector<4x1xf32>
    %18 = tpu.reciprocal %17 : vector<4x1xf32> -> vector<4x1xf32>
    %19 = vector.broadcast %1 : f32 to vector<4x1xf32>
    %20 = arith.mulf %19, %18 : vector<4x1xf32>
    %21 = vector.broadcast %20 : vector<4x1xf32> to vector<4x32xf32>
    %22 = arith.mulf %9, %21 : vector<4x32xf32>
    %23 = vector.broadcast %2 : f32 to vector<4x32xf32>
    %24 = arith.addf %22, %23 : vector<4x32xf32>
    %25 = vector.extract_strided_slice %0 {offsets = [0, 32], sizes = [4, 32], strides = [1, 1]} : vector<4x128xf32> to vector<4x32xf32>
    %cst_7 = arith.constant dense<0.000000e+00> : vector<4xf32>
    %26 = vector.multi_reduction <add>, %25, %cst_7 [1] : vector<4x32xf32> to vector<4xf32>
    %27 = vector.shape_cast %26 : vector<4xf32> to vector<4x1xf32>
    %cst_8 = arith.constant 3.200000e+01 : f32
    %28 = vector.broadcast %cst_8 : f32 to vector<4x1xf32>
    %29 = arith.divf %27, %28 : vector<4x1xf32>
    %30 = vector.broadcast %29 : vector<4x1xf32> to vector<4x32xf32>
    %31 = arith.subf %25, %30 : vector<4x32xf32>
    %32 = arith.mulf %31, %31 : vector<4x32xf32>
    %cst_9 = arith.constant dense<0.000000e+00> : vector<4xf32>
    %33 = vector.multi_reduction <add>, %32, %cst_9 [1] : vector<4x32xf32> to vector<4xf32>
    %34 = vector.shape_cast %33 : vector<4xf32> to vector<4x1xf32>
    %cst_10 = arith.constant 3.100000e+01 : f32
    %35 = vector.broadcast %cst_10 : f32 to vector<4x1xf32>
    %36 = arith.divf %34, %35 : vector<4x1xf32>
    %37 = math.sqrt %36 : vector<4x1xf32>
    %cst_11 = arith.constant 9.99999997E-7 : f32
    %38 = vector.broadcast %cst_11 : f32 to vector<4x1xf32>
    %39 = arith.addf %37, %38 : vector<4x1xf32>
    %40 = tpu.reciprocal %39 : vector<4x1xf32> -> vector<4x1xf32>
    %41 = vector.broadcast %1 : f32 to vector<4x1xf32>
    %42 = arith.mulf %41, %40 : vector<4x1xf32>
    %43 = vector.broadcast %42 : vector<4x1xf32> to vector<4x32xf32>
    %44 = arith.mulf %31, %43 : vector<4x32xf32>
    %45 = vector.broadcast %2 : f32 to vector<4x32xf32>
    %46 = arith.addf %44, %45 : vector<4x32xf32>
    %47 = vector.extract_strided_slice %0 {offsets = [0, 64], sizes = [4, 32], strides = [1, 1]} : vector<4x128xf32> to vector<4x32xf32>
    %cst_12 = arith.constant dense<0.000000e+00> : vector<4xf32>
    %48 = vector.multi_reduction <add>, %47, %cst_12 [1] : vector<4x32xf32> to vector<4xf32>
    %49 = vector.shape_cast %48 : vector<4xf32> to vector<4x1xf32>
    %cst_13 = arith.constant 3.200000e+01 : f32
    %50 = vector.broadcast %cst_13 : f32 to vector<4x1xf32>
    %51 = arith.divf %49, %50 : vector<4x1xf32>
    %52 = vector.broadcast %51 : vector<4x1xf32> to vector<4x32xf32>
    %53 = arith.subf %47, %52 : vector<4x32xf32>
    %54 = arith.mulf %53, %53 : vector<4x32xf32>
    %cst_14 = arith.constant dense<0.000000e+00> : vector<4xf32>
    %55 = vector.multi_reduction <add>, %54, %cst_14 [1] : vector<4x32xf32> to vector<4xf32>
    %56 = vector.shape_cast %55 : vector<4xf32> to vector<4x1xf32>
    %cst_15 = arith.constant 3.100000e+01 : f32
    %57 = vector.broadcast %cst_15 : f32 to vector<4x1xf32>
    %58 = arith.divf %56, %57 : vector<4x1xf32>
    %59 = math.sqrt %58 : vector<4x1xf32>
    %cst_16 = arith.constant 9.99999997E-7 : f32
    %60 = vector.broadcast %cst_16 : f32 to vector<4x1xf32>
    %61 = arith.addf %59, %60 : vector<4x1xf32>
    %62 = tpu.reciprocal %61 : vector<4x1xf32> -> vector<4x1xf32>
    %63 = vector.broadcast %1 : f32 to vector<4x1xf32>
    %64 = arith.mulf %63, %62 : vector<4x1xf32>
    %65 = vector.broadcast %64 : vector<4x1xf32> to vector<4x32xf32>
    %66 = arith.mulf %53, %65 : vector<4x32xf32>
    %67 = vector.broadcast %2 : f32 to vector<4x32xf32>
    %68 = arith.addf %66, %67 : vector<4x32xf32>
    %69 = vector.extract_strided_slice %0 {offsets = [0, 96], sizes = [4, 32], strides = [1, 1]} : vector<4x128xf32> to vector<4x32xf32>
    %cst_17 = arith.constant dense<0.000000e+00> : vector<4xf32>
    %70 = vector.multi_reduction <add>, %69, %cst_17 [1] : vector<4x32xf32> to vector<4xf32>
    %71 = vector.shape_cast %70 : vector<4xf32> to vector<4x1xf32>
    %cst_18 = arith.constant 3.200000e+01 : f32
    %72 = vector.broadcast %cst_18 : f32 to vector<4x1xf32>
    %73 = arith.divf %71, %72 : vector<4x1xf32>
    %74 = vector.broadcast %73 : vector<4x1xf32> to vector<4x32xf32>
    %75 = arith.subf %69, %74 : vector<4x32xf32>
    %76 = arith.mulf %75, %75 : vector<4x32xf32>
    %cst_19 = arith.constant dense<0.000000e+00> : vector<4xf32>
    %77 = vector.multi_reduction <add>, %76, %cst_19 [1] : vector<4x32xf32> to vector<4xf32>
    %78 = vector.shape_cast %77 : vector<4xf32> to vector<4x1xf32>
    %cst_20 = arith.constant 3.100000e+01 : f32
    %79 = vector.broadcast %cst_20 : f32 to vector<4x1xf32>
    %80 = arith.divf %78, %79 : vector<4x1xf32>
    %81 = math.sqrt %80 : vector<4x1xf32>
    %cst_21 = arith.constant 9.99999997E-7 : f32
    %82 = vector.broadcast %cst_21 : f32 to vector<4x1xf32>
    %83 = arith.addf %81, %82 : vector<4x1xf32>
    %84 = tpu.reciprocal %83 : vector<4x1xf32> -> vector<4x1xf32>
    %85 = vector.broadcast %1 : f32 to vector<4x1xf32>
    %86 = arith.mulf %85, %84 : vector<4x1xf32>
    %87 = vector.broadcast %86 : vector<4x1xf32> to vector<4x32xf32>
    %88 = arith.mulf %75, %87 : vector<4x32xf32>
    %89 = vector.broadcast %2 : f32 to vector<4x32xf32>
    %90 = arith.addf %88, %89 : vector<4x32xf32>
    %91 = tpu.concatenate %24, %46, %68, %90 in 1 : vector<4x32xf32>, vector<4x32xf32>, vector<4x32xf32>, vector<4x32xf32> -> vector<4x128xf32>
    %c0_22 = arith.constant 0 : index
    %c0_23 = arith.constant 0 : index
    %92 = vector.load %arg4[%c0_22, %c0_23] : memref<4x128xf32, #tpu.memory_space<vmem>>, vector<4x128xf32>
    tpu.vector_store %arg4[%c0_22, %c0_23], %91 {strides = array<i32>} : memref<4x128xf32, #tpu.memory_space<vmem>>, vector<4x128xf32>,
    return
  }
  func.func @transform_0(%arg0: i32) -> i32 {
    %c0_i32 = arith.constant 0 : i32
    %c0_i32_0 = arith.constant 0 : i32
    return %c0_i32 : i32
  }
  func.func @transform_1(%arg0: i32) -> i32 {
    %c0_i32 = arith.constant 0 : i32
    %c0_i32_0 = arith.constant 0 : i32
    return %c0_i32 : i32
  }
  func.func @transform_2(%arg0: i32) -> (i32, i32) {
    %c0_i32 = arith.constant 0 : i32
    %c0_i32_0 = arith.constant 0 : i32
    return %arg0, %c0_i32 : i32, i32
  }
  func.func @transform_3(%arg0: i32) -> (i32, i32) {
    %c0_i32 = arith.constant 0 : i32
    %c0_i32_0 = arith.constant 0 : i32
    return %arg0, %c0_i32 : i32, i32
  }
}

</mosaic_0001>

<llo_original>
// kernel: tpu_custom_call.1
$region0: #{tpu_custom_call.1}
  #allocation0 [shape = 'u32[]', space=smem, size = 0x4, offset = 0x4, fixed_abs, tag = 'smem constant byte address 0x4 - core index']
  #allocation1 [shape = 'u32[144,128]{1,0:T(1,128)}', space=vmem, size = 0x12000, scoped, tag = 'internal scratch']
  #allocation2 [shape = 'f32[1]{0:T(128)S(6)}', space=smem, size = 0x200, scoped, tag = 'scoped memory for tpu_custom_call.1']
  #allocation3 [shape = 'f32[1]{0:T(128)S(6)}', space=smem, size = 0x200, scoped, tag = 'scoped memory for tpu_custom_call.1']
  %s0 = inlined_call_operand.<no memory space> [shape: f32[1], index: 0, kind: input, shape index: {}]
  %s1 = inlined_call_operand.<no memory space> [shape: f32[1], index: 1, kind: input, shape index: {}]
  %s2 = inlined_call_operand.vmem [shape: f32[4,128], index: 2, kind: input, shape index: {}]
  %s3 = inlined_call_operand.hbm [shape: f32[4,128], index: 3, kind: output, shape index: {}]
  %s4 = sld [smem:[#allocation0]]
  $region22: #{tpu_custom_call.1} parent=0
    _
  %s6 = ssub.s32 1, %s4
  %s7 = scalar_select 0, %s6, %s4
  %8 = sst [smem:[#allocation2]] %s0
  %9 = sst [smem:[#allocation3]] %s1
  $region1: #{tpu_custom_call.1} parent=0
    #allocation4 [shape = 'u8[2048]{0}', space=vmem, size = 0x800, scoped, tag = 'output window, operand 0, single buffered']
    #allocation5 [shape = 's32[1]{0}', space=sflag, size = 0x4, scoped, tag = 'scoped memory for tpu_custom_call.1']
    %10 = vsyncpa [#allocation5], 0
    // Predicated region
    $region2: #{tpu_custom_call.1} parent=1 // pred_check
      _
    $region3: #{tpu_custom_call.1} parent=1 // pred_check_branch
      %12 = sbr.rel (0) target = $region5
    $region4: #{tpu_custom_call.1} parent=1 // pred_region
      _
    $region5: #{tpu_custom_call.1} parent=1 // pred_fallthru
      _
    // Predicated region
    $region6: #{tpu_custom_call.1} parent=1 // pred_check
      _
    $region7: #{tpu_custom_call.1} parent=1 // pred_check_branch
      %14 = sbr.rel (0) target = $region9
    $region8: #{tpu_custom_call.1} parent=1 // pred_region
      _
    $region9: #{tpu_custom_call.1} parent=1 // pred_fallthru
      _
    // Predicated region
    $region10: #{tpu_custom_call.1} parent=1 // pred_check
      _
    $region11: #{tpu_custom_call.1} parent=1 // pred_check_branch
      %16 = sbr.rel (0) target = $region13
    $region12: #{tpu_custom_call.1} parent=1 // pred_region
      _
    $region13: #{tpu_custom_call.1} parent=1 // pred_fallthru
      _
    %v17 = vld [vmem:[%s2] sm:$0xf]
    %s18 = sld [smem:[#allocation2]]
    %s19 = sld [smem:[#allocation3]]
    %vm20 = vcmask 257024
    %v21 = vsel %vm20, %v17, 0.0
    %22 = vadd.xlane.f32.xlu0 %v21
    %v23 = vpop.xlane.xlu0 %22
    %v24 = vrcp.pop 32.0
    %v25 = vmul.f32 %v23, %v24
    %v26 = vsub.f32 %v17, %v25
    %v27 = vmul.f32 %v26, %v26
    %v28 = vsel %vm20, %v27, 0.0
    %29 = vadd.xlane.f32.xlu0 %v28
    %v30 = vpop.xlane.xlu0 %29
    %v31 = vrcp.pop 31.0
    %v32 = vmul.f32 %v30, %v31
    %v33 = vrsqrt.pop %v32
    %v34 = vmul.f32 %v32, %v33
    %vm35 = vcmp.eq.f32.partialorder %v32, inf
    %v36 = vsel %vm35, %v32, %v34
    %vm37 = vcmp.eq.f32.partialorder %v32, 0.0
    %v38 = vand.u32 %v32, 2147483648
    %v39 = vsel %vm37, %v38, %v36
    %v40 = vadd.f32 %v39, 1e-06
    %v41 = vrcp.pop %v40
    %v42 = vstv %s18
    %v43 = vmul.f32 %v42, %v41
    %v44 = vmul.f32 %v26, %v43
    %v45 = vstv %s19
    %v46 = vadd.f32 %v44, %v45
    %48 = vrot.lane.b32.xlu0 %v17, 96
    %v49 = vpop.permute.xlu0 %48
    %v51 = vsel %vm20, %v49, 0.0
    %52 = vadd.xlane.f32.xlu0 %v51
    %v53 = vpop.xlane.xlu0 %52
    %v54 = vmul.f32 %v53, %v24
    %v55 = vsub.f32 %v17, %v54
    %v56 = vmul.f32 %v55, %v55
    %58 = vrot.lane.b32.xlu0 %v56, 96
    %v59 = vpop.permute.xlu0 %58
    %v61 = vsel %vm20, %v59, 0.0
    %62 = vadd.xlane.f32.xlu0 %v61
    %v63 = vpop.xlane.xlu0 %62
    %v64 = vmul.f32 %v63, %v31
    %v65 = vrsqrt.pop %v64
    %v66 = vmul.f32 %v64, %v65
    %vm67 = vcmp.eq.f32.partialorder %v64, inf
    %v68 = vsel %vm67, %v64, %v66
    %vm69 = vcmp.eq.f32.partialorder %v64, 0.0
    %v70 = vand.u32 %v64, 2147483648
    %v71 = vsel %vm69, %v70, %v68
    %v72 = vadd.f32 %v71, 1e-06
    %v73 = vrcp.pop %v72
    %v74 = vmul.f32 %v42, %v73
    %v75 = vmul.f32 %v55, %v74
    %v76 = vadd.f32 %v75, %v45
    %77 = vrot.lane.b32.xlu0 %v17, 64
    %v78 = vpop.permute.xlu0 %77
    %v80 = vsel %vm20, %v78, 0.0
    %81 = vadd.xlane.f32.xlu0 %v80
    %v82 = vpop.xlane.xlu0 %81
    %v83 = vmul.f32 %v82, %v24
    %v84 = vsub.f32 %v17, %v83
    %v85 = vmul.f32 %v84, %v84
    %87 = vrot.lane.b32.xlu0 %v85, 64
    %v88 = vpop.permute.xlu0 %87
    %v90 = vsel %vm20, %v88, 0.0
    %91 = vadd.xlane.f32.xlu0 %v90
    %v92 = vpop.xlane.xlu0 %91
    %v93 = vmul.f32 %v92, %v31
    %v94 = vrsqrt.pop %v93
    %v95 = vmul.f32 %v93, %v94
    %vm96 = vcmp.eq.f32.partialorder %v93, inf
    %v97 = vsel %vm96, %v93, %v95
    %vm98 = vcmp.eq.f32.partialorder %v93, 0.0
    %v99 = vand.u32 %v93, 2147483648
    %v100 = vsel %vm98, %v99, %v97
    %v101 = vadd.f32 %v100, 1e-06
    %v102 = vrcp.pop %v101
    %v103 = vmul.f32 %v42, %v102
    %v104 = vmul.f32 %v84, %v103
    %v105 = vadd.f32 %v104, %v45
    %106 = vrot.lane.b32.xlu0 %v17, 32
    %v107 = vpop.permute.xlu0 %106
    %v109 = vsel %vm20, %v107, 0.0
    %110 = vadd.xlane.f32.xlu0 %v109
    %v111 = vpop.xlane.xlu0 %110
    %v112 = vmul.f32 %v111, %v24
    %v113 = vsub.f32 %v17, %v112
    %v114 = vmul.f32 %v113, %v113
    %116 = vrot.lane.b32.xlu0 %v114, 32
    %v117 = vpop.permute.xlu0 %116
    %v119 = vsel %vm20, %v117, 0.0
    %120 = vadd.xlane.f32.xlu0 %v119
    %v121 = vpop.xlane.xlu0 %120
    %v122 = vmul.f32 %v121, %v31
    %v123 = vrsqrt.pop %v122
    %v124 = vmul.f32 %v122, %v123
    %vm125 = vcmp.eq.f32.partialorder %v122, inf
    %v126 = vsel %vm125, %v122, %v124
    %vm127 = vcmp.eq.f32.partialorder %v122, 0.0
    %v128 = vand.u32 %v122, 2147483648
    %v129 = vsel %vm127, %v128, %v126
    %v130 = vadd.f32 %v129, 1e-06
    %v131 = vrcp.pop %v130
    %v132 = vmul.f32 %v42, %v131
    %v133 = vmul.f32 %v113, %v132
    %v134 = vadd.f32 %v133, %v45
    %vm135 = vcmask 261120
    %v136 = vsel %vm135, %v46, %v76
    %vm137 = vcmask 523264
    %v138 = vsel %vm137, %v136, %v105
    %vm139 = vcmask 785408
    %v140 = vsel %vm139, %v138, %v134
    %141 = vst [vmem:[#allocation4] sm:$0xf] %v140
    // Predicated region
    $region14: #{tpu_custom_call.1} parent=1 // pred_check
      _
    $region15: #{tpu_custom_call.1} parent=1 // pred_check_branch
      %143 = sbr.rel (0) target = $region17
    $region16: #{tpu_custom_call.1} parent=1 // pred_region
      %s145 = ssub.s32 64, 64
      %146 = vsyncadd [#allocation5], %s145
      %s148 = sshll.u32 [#allocation4], 4
      %s149 = int_to_ptr.vmem [resolvable:$true] %s148
      %151 = dma.vmem_to_hbm [thread:$0]  %s149, 64, %s3, [#allocation5]
    $region17: #{tpu_custom_call.1} parent=1 // pred_fallthru
      _
    // Predicated region
    $region18: #{tpu_custom_call.1} parent=1 // pred_check
      _
    $region19: #{tpu_custom_call.1} parent=1 // pred_check_branch
      %153 = sbr.rel (0) target = $region21
    $region20: #{tpu_custom_call.1} parent=1 // pred_region
      %154 = dma.done [#allocation5], 64
    $region21: #{tpu_custom_call.1} parent=1 // pred_fallthru
      _
    %155 = vsyncpa [#allocation5], 1

</llo_original>
